<compile_context>
chip_gen: v6e
topology: v6e:2x2x1
jax: 0.10.0
libtpu: 0.0.40
codegen_flags: <defaults>
</compile_context>

<pallas_src>
import functools

import jax
import jax.numpy as jnp
from jax.experimental import pallas as pl
from jax.experimental.pallas import tpu as pltpu


def _tier_kernel(x_ref, wv_ref, bv_ref, wu_ref, bu_ref, ww_ref, bw_ref,
                 wc_ref, bc_ref,
                 afeat_ref, logits_ref,
                 m_ref, l_ref, acc_ref,
                 *, n_valid, tile_n):
    i = pl.program_id(0)

    @pl.when(i == 0)
    def _():
        m_ref[...] = jnp.full_like(m_ref, -1e30)
        l_ref[...] = jnp.zeros_like(l_ref)
        acc_ref[...] = jnp.zeros_like(acc_ref)

    x = x_ref[...]                                   # (TN, L)
    xf = x.astype(jnp.float32)

    # Gated attention branches (MXU matmuls, f32 accumulation).
    av = jnp.tanh(
        jnp.dot(x, wv_ref[...], preferred_element_type=jnp.float32)
        + bv_ref[...].astype(jnp.float32))           # (TN, D)
    au = jax.nn.sigmoid(
        jnp.dot(x, wu_ref[...], preferred_element_type=jnp.float32)
        + bu_ref[...].astype(jnp.float32))           # (TN, D)
    gate = (av * au).astype(ww_ref.dtype)
    s = (jnp.dot(gate, ww_ref[...], preferred_element_type=jnp.float32)
         + bw_ref[...].astype(jnp.float32))          # (TN, 1) attention scores

    # Mask rows introduced by padding N up to a multiple of tile_n.
    row = i * tile_n + jax.lax.broadcasted_iota(jnp.int32, s.shape, 0)
    s = jnp.where(row < n_valid, s, -1e30)

    # Online softmax over the instance axis (reduction carried across grid steps).
    m_prev = m_ref[...]                              # (1, 1)
    m_new = jnp.maximum(m_prev, jnp.max(s, axis=0, keepdims=True))
    alpha = jnp.exp(m_prev - m_new)                  # (1, 1)
    p = jnp.exp(s - m_new)                           # (TN, 1)
    l_ref[...] = alpha * l_ref[...] + jnp.sum(p, axis=0, keepdims=True)
    acc_ref[...] = alpha * acc_ref[...] + jnp.sum(p * xf, axis=0, keepdims=True)
    m_ref[...] = m_new

    @pl.when(i == pl.num_programs(0) - 1)
    def _():
        afeat = acc_ref[...] / l_ref[...]            # (1, L) == softmax(A) @ x
        afeat_ref[...] = afeat.astype(afeat_ref.dtype)
        logits = (jnp.dot(afeat.astype(wc_ref.dtype), wc_ref[...],
                          preferred_element_type=jnp.float32)
                  + bc_ref[...].astype(jnp.float32))
        logits_ref[...] = logits.astype(logits_ref.dtype)


def tier_forward(x, params, *, tile_n=16):
    """Fused Tier forward (stains=None). Returns (afeat (1, L), logits (1, C))."""
    N, L = x.shape
    D = params["wv"].shape[1]
    C = params["wc"].shape[1]
    assert params["wv"].shape == (L, D) and params["wu"].shape == (L, D)
    assert params["ww"].shape == (D, 1) and params["wc"].shape == (L, C)
    assert tile_n % 8 == 0

    n_pad = -(-N // tile_n) * tile_n
    if n_pad != N:
        x = jnp.pad(x, ((0, n_pad - N), (0, 0)))
    grid = (n_pad // tile_n,)

    kernel = functools.partial(_tier_kernel, n_valid=N, tile_n=tile_n)

    afeat, logits = pl.pallas_call(
        kernel,
        out_shape=(jax.ShapeDtypeStruct((1, L), x.dtype),
                   jax.ShapeDtypeStruct((1, C), x.dtype)),
        grid_spec=pltpu.PrefetchScalarGridSpec(
            num_scalar_prefetch=0,
            grid=grid,
            in_specs=[
                pl.BlockSpec((tile_n, L), lambda i: (i, 0)),   # x (streamed)
                pl.BlockSpec((L, D), lambda i: (0, 0)),        # Wv (resident)
                pl.BlockSpec((1, D), lambda i: (0, 0)),        # bv
                pl.BlockSpec((L, D), lambda i: (0, 0)),        # Wu
                pl.BlockSpec((1, D), lambda i: (0, 0)),        # bu
                pl.BlockSpec((D, 1), lambda i: (0, 0)),        # Ww
                pl.BlockSpec((1, 1), lambda i: (0, 0)),        # bw
                pl.BlockSpec((L, C), lambda i: (0, 0)),        # Wc
                pl.BlockSpec((1, C), lambda i: (0, 0)),        # bc
            ],
            out_specs=[
                pl.BlockSpec((1, L), lambda i: (0, 0)),        # afeat
                pl.BlockSpec((1, C), lambda i: (0, 0)),        # logits
            ],
            scratch_shapes=[
                pltpu.VMEM((1, 1), jnp.float32),               # running max m
                pltpu.VMEM((1, 1), jnp.float32),               # running sum l
                pltpu.VMEM((1, L), jnp.float32),               # running weighted acc
            ],
        ),
        compiler_params=pltpu.CompilerParams(
            # N axis carries the online-softmax reduction -> must be sequential.
            dimension_semantics=("arbitrary",)),
    )(x, params["wv"], params["bv"], params["wu"], params["bu"],
      params["ww"], params["bw"], params["wc"], params["bc"])
    return afeat, logits


def init_params(key, mDim, D, num_cls):
    # Deterministic synthetic init (Kaiming-uniform-ish scale, like nn.Linear).
    ks = jax.random.split(key, 8)
    s_l = 1.0 / jnp.sqrt(jnp.float32(mDim))
    s_d = 1.0 / jnp.sqrt(jnp.float32(D))
    wv = jax.random.uniform(ks[0], (mDim, D), jnp.float32, -s_l, s_l)
    bv = jax.random.uniform(ks[1], (1, D), jnp.float32, -s_l, s_l)
    wu = jax.random.uniform(ks[2], (mDim, D), jnp.float32, -s_l, s_l)
    bu = jax.random.uniform(ks[3], (1, D), jnp.float32, -s_l, s_l)
    ww = jax.random.uniform(ks[4], (D, 1), jnp.float32, -s_d, s_d)
    bw = jax.random.uniform(ks[5], (1, 1), jnp.float32, -s_d, s_d)
    wc = jax.random.uniform(ks[6], (mDim, num_cls), jnp.float32, -s_l, s_l)
    bc = jax.random.uniform(ks[7], (1, num_cls), jnp.float32, -s_l, s_l)
    return dict(wv=wv, bv=bv, wu=wu, bu=bu, ww=ww, bw=bw, wc=wc, bc=bc)


def _reference_forward(x, p):
    # Pure-JAX reference (mirrors the PyTorch Tier forward, stains=None).
    av = jnp.tanh(x @ p["wv"] + p["bv"])
    au = jax.nn.sigmoid(x @ p["wu"] + p["bu"])
    a = (av * au) @ p["ww"] + p["bw"]           # (N, 1)
    a = jax.nn.softmax(a.T, axis=1)             # (1, N)
    afeat = a @ x                               # (1, mDim)
    logits = afeat @ p["wc"] + p["bc"]          # (1, num_cls)
    return afeat, logits


if __name__ == "__main__":
    key = jax.random.PRNGKey(0)
    k_x, k_p = jax.random.split(key)

    N = 50          # instances in the bag (not a multiple of tile_n -> tests masking)
    mDim = 128      # L (lane-dense)
    D = 128         # attention hidden dim (Attention_Gated default)
    num_cls = 4

    x = jax.random.normal(k_x, (N, mDim), jnp.float32)
    params = init_params(k_p, mDim, D, num_cls)

    afeat, logits = tier_forward(x, params, tile_n=16)
    afeat, logits = jax.block_until_ready((afeat, logits))

    ref_afeat, ref_logits = _reference_forward(x, params)
    assert afeat.shape == (1, mDim) and logits.shape == (1, num_cls)
    assert jnp.allclose(afeat, ref_afeat, atol=1e-4, rtol=1e-4)
    assert jnp.allclose(logits, ref_logits, atol=1e-4, rtol=1e-4)

    print("KERNEL_OK")
</pallas_src>

<mosaic_0001>
module attributes {stable_mosaic.version = 11 : i64} {
  func.func @_tier_kernel(%arg0: i32, %arg1: memref<16x128xf32, #tpu.memory_space<vmem>>, %arg2: memref<128x128xf32, #tpu.memory_space<vmem>>, %arg3: memref<1x128xf32, #tpu.memory_space<vmem>>, %arg4: memref<128x128xf32, #tpu.memory_space<vmem>>, %arg5: memref<1x128xf32, #tpu.memory_space<vmem>>, %arg6: memref<128x1xf32, #tpu.memory_space<vmem>>, %arg7: memref<1x1xf32, #tpu.memory_space<vmem>>, %arg8: memref<128x4xf32, #tpu.memory_space<vmem>>, %arg9: memref<1x4xf32, #tpu.memory_space<vmem>>, %arg10: memref<1x128xf32, #tpu.memory_space<vmem>>, %arg11: memref<1x4xf32, #tpu.memory_space<vmem>>, %arg12: memref<1x1xf32, #tpu.memory_space<vmem>>, %arg13: memref<1x1xf32, #tpu.memory_space<vmem>>, %arg14: memref<1x128xf32, #tpu.memory_space<vmem>>) attributes {dimension_semantics = [#tpu.dimension_semantics<arbitrary>], iteration_bounds = array<i64: 4>, scalar_prefetch = 0 : i64, scratch_operands = 3 : i64, tpu.core_type = #tpu.core_type<tc>, window_params = [{transform_indices = @transform_0, window_bounds = array<i64: 16, 128>}, {pipeline_mode = #tpu.pipeline_mode<synchronous>, transform_indices = @transform_1, window_bounds = array<i64: 128, 128>}, {pipeline_mode = #tpu.pipeline_mode<synchronous>, transform_indices = @transform_2, window_bounds = array<i64: 1, 128>}, {pipeline_mode = #tpu.pipeline_mode<synchronous>, transform_indices = @transform_3, window_bounds = array<i64: 128, 128>}, {pipeline_mode = #tpu.pipeline_mode<synchronous>, transform_indices = @transform_4, window_bounds = array<i64: 1, 128>}, {pipeline_mode = #tpu.pipeline_mode<synchronous>, transform_indices = @transform_5, window_bounds = array<i64: 128, 1>}, {pipeline_mode = #tpu.pipeline_mode<synchronous>, transform_indices = @transform_6, window_bounds = array<i64: 1, 1>}, {pipeline_mode = #tpu.pipeline_mode<synchronous>, transform_indices = @transform_7, window_bounds = array<i64: 128, 4>}, {pipeline_mode = #tpu.pipeline_mode<synchronous>, transform_indices = @transform_8, window_bounds = array<i64: 1, 4>}, {pipeline_mode = #tpu.pipeline_mode<synchronous>, transform_indices = @transform_9, window_bounds = array<i64: 1, 128>}, {pipeline_mode = #tpu.pipeline_mode<synchronous>, transform_indices = @transform_10, window_bounds = array<i64: 1, 4>}]} {
    %c0_i32 = arith.constant 0 : i32
    %0 = arith.cmpi eq, %arg0, %c0_i32 : i32
    %1 = arith.extui %0 : i1 to i32
    %c0_i32_0 = arith.constant 0 : i32
    %2 = arith.cmpi ne, %1, %c0_i32_0 : i32
    scf.if %2 {
      %cst_34 = arith.constant -1.000000e+30 : f32
      %62 = vector.broadcast %cst_34 : f32 to vector<1x1xf32>
      %c0_35 = arith.constant 0 : index
      %c0_36 = arith.constant 0 : index
      %63 = vector.load %arg12[%c0_35, %c0_36] : memref<1x1xf32, #tpu.memory_space<vmem>>, vector<1x1xf32>
      tpu.vector_store %arg12[%c0_35, %c0_36], %62 {strides = array<i32>} : memref<1x1xf32, #tpu.memory_space<vmem>>, vector<1x1xf32>,
      %cst_37 = arith.constant 0.000000e+00 : f32
      %64 = vector.broadcast %cst_37 : f32 to vector<1x1xf32>
      %c0_38 = arith.constant 0 : index
      %c0_39 = arith.constant 0 : index
      %65 = vector.load %arg13[%c0_38, %c0_39] : memref<1x1xf32, #tpu.memory_space<vmem>>, vector<1x1xf32>
      tpu.vector_store %arg13[%c0_38, %c0_39], %64 {strides = array<i32>} : memref<1x1xf32, #tpu.memory_space<vmem>>, vector<1x1xf32>,
      %cst_40 = arith.constant 0.000000e+00 : f32
      %66 = vector.broadcast %cst_40 : f32 to vector<1x128xf32>
      %c0_41 = arith.constant 0 : index
      %c0_42 = arith.constant 0 : index
      %67 = vector.load %arg14[%c0_41, %c0_42] : memref<1x128xf32, #tpu.memory_space<vmem>>, vector<1x128xf32>
      tpu.vector_store %arg14[%c0_41, %c0_42], %66 {strides = array<i32>} : memref<1x128xf32, #tpu.memory_space<vmem>>, vector<1x128xf32>,
    } else {
    }
    %c0 = arith.constant 0 : index
    %c0_1 = arith.constant 0 : index
    %3 = vector.load %arg1[%c0, %c0_1] : memref<16x128xf32, #tpu.memory_space<vmem>>, vector<16x128xf32>
    %c0_2 = arith.constant 0 : index
    %c0_3 = arith.constant 0 : index
    %4 = vector.load %arg2[%c0_2, %c0_3] : memref<128x128xf32, #tpu.memory_space<vmem>>, vector<128x128xf32>
    %cst = arith.constant dense<0.000000e+00> : vector<16x128xf32>
    %5 = tpu.matmul %3, %4, %cst {dimension_numbers = #tpu.dot_dimension_numbers<[1], [0], [0], [1], [0, 0, 1, 1], [], []>} : vector<16x128xf32>, vector<128x128xf32>, vector<16x128xf32> -> vector<16x128xf32>
    %c0_4 = arith.constant 0 : index
    %c0_5 = arith.constant 0 : index
    %6 = vector.load %arg3[%c0_4, %c0_5] : memref<1x128xf32, #tpu.memory_space<vmem>>, vector<1x128xf32>
    %7 = vector.broadcast %6 : vector<1x128xf32> to vector<16x128xf32>
    %8 = arith.addf %5, %7 : vector<16x128xf32>
    %9 = math.tanh %8 : vector<16x128xf32>
    %c0_6 = arith.constant 0 : index
    %c0_7 = arith.constant 0 : index
    %10 = vector.load %arg4[%c0_6, %c0_7] : memref<128x128xf32, #tpu.memory_space<vmem>>, vector<128x128xf32>
    %cst_8 = arith.constant dense<0.000000e+00> : vector<16x128xf32>
    %11 = tpu.matmul %3, %10, %cst_8 {dimension_numbers = #tpu.dot_dimension_numbers<[1], [0], [0], [1], [0, 0, 1, 1], [], []>} : vector<16x128xf32>, vector<128x128xf32>, vector<16x128xf32> -> vector<16x128xf32>
    %c0_9 = arith.constant 0 : index
    %c0_10 = arith.constant 0 : index
    %12 = vector.load %arg5[%c0_9, %c0_10] : memref<1x128xf32, #tpu.memory_space<vmem>>, vector<1x128xf32>
    %13 = vector.broadcast %12 : vector<1x128xf32> to vector<16x128xf32>
    %14 = arith.addf %11, %13 : vector<16x128xf32>
    %15 = arith.negf %14 : vector<16x128xf32>
    %16 = math.exp %15 : vector<16x128xf32>
    %cst_11 = arith.constant 1.000000e+00 : f32
    %17 = vector.broadcast %cst_11 : f32 to vector<16x128xf32>
    %18 = arith.addf %17, %16 : vector<16x128xf32>
    %19 = arith.divf %17, %18 : vector<16x128xf32>
    %20 = arith.mulf %9, %19 : vector<16x128xf32>
    %c0_12 = arith.constant 0 : index
    %c0_13 = arith.constant 0 : index
    %21 = vector.load %arg6[%c0_12, %c0_13] : memref<128x1xf32, #tpu.memory_space<vmem>>, vector<128x1xf32>
    %cst_14 = arith.constant dense<0.000000e+00> : vector<16x1xf32>
    %22 = tpu.matmul %20, %21, %cst_14 {dimension_numbers = #tpu.dot_dimension_numbers<[1], [0], [0], [1], [0, 0, 1, 1], [], []>} : vector<16x128xf32>, vector<128x1xf32>, vector<16x1xf32> -> vector<16x1xf32>
    %c0_15 = arith.constant 0 : index
    %c0_16 = arith.constant 0 : index
    %23 = vector.load %arg7[%c0_15, %c0_16] : memref<1x1xf32, #tpu.memory_space<vmem>>, vector<1x1xf32>
    %24 = vector.broadcast %23 : vector<1x1xf32> to vector<16x1xf32>
    %25 = arith.addf %22, %24 : vector<16x1xf32>
    %c16_i32 = arith.constant 16 : i32
    %26 = arith.muli %arg0, %c16_i32 : i32
    %27 = tpu.iota {dimensions = array<i32: 0>} : vector<16x1xi32>
    %28 = vector.broadcast %26 : i32 to vector<16x1xi32>
    %29 = arith.addi %28, %27 : vector<16x1xi32>
    %c50_i32 = arith.constant 50 : i32
    %30 = vector.broadcast %c50_i32 : i32 to vector<16x1xi32>
    %31 = arith.cmpi slt, %29, %30 : vector<16x1xi32>
    %cst_17 = arith.constant -1.000000e+30 : f32
    %32 = vector.broadcast %cst_17 : f32 to vector<16x1xf32>
    %33 = arith.select %31, %25, %32 : vector<16x1xi1>, vector<16x1xf32>
    %c0_18 = arith.constant 0 : index
    %c0_19 = arith.constant 0 : index
    %34 = vector.load %arg12[%c0_18, %c0_19] : memref<1x1xf32, #tpu.memory_space<vmem>>, vector<1x1xf32>
    %cst_20 = arith.constant dense<0xFF800000> : vector<1xf32>
    %35 = vector.multi_reduction <maximumf>, %33, %cst_20 [0] : vector<16x1xf32> to vector<1xf32>
    %36 = vector.shape_cast %35 : vector<1xf32> to vector<1x1xf32>
    %37 = arith.maximumf %34, %36 : vector<1x1xf32>
    %38 = arith.subf %34, %37 : vector<1x1xf32>
    %39 = math.exp %38 : vector<1x1xf32>
    %40 = vector.broadcast %37 : vector<1x1xf32> to vector<16x1xf32>
    %41 = arith.subf %33, %40 : vector<16x1xf32>
    %42 = math.exp %41 : vector<16x1xf32>
    %c0_21 = arith.constant 0 : index
    %c0_22 = arith.constant 0 : index
    %43 = vector.load %arg13[%c0_21, %c0_22] : memref<1x1xf32, #tpu.memory_space<vmem>>, vector<1x1xf32>
    %44 = arith.mulf %39, %43 : vector<1x1xf32>
    %cst_23 = arith.constant dense<0.000000e+00> : vector<1xf32>
    %45 = vector.multi_reduction <add>, %42, %cst_23 [0] : vector<16x1xf32> to vector<1xf32>
    %46 = vector.shape_cast %45 : vector<1xf32> to vector<1x1xf32>
    %47 = arith.addf %44, %46 : vector<1x1xf32>
    %c0_24 = arith.constant 0 : index
    %c0_25 = arith.constant 0 : index
    %48 = vector.load %arg13[%c0_24, %c0_25] : memref<1x1xf32, #tpu.memory_space<vmem>>, vector<1x1xf32>
    tpu.vector_store %arg13[%c0_24, %c0_25], %47 {strides = array<i32>} : memref<1x1xf32, #tpu.memory_space<vmem>>, vector<1x1xf32>,
    %c0_26 = arith.constant 0 : index
    %c0_27 = arith.constant 0 : index
    %49 = vector.load %arg14[%c0_26, %c0_27] : memref<1x128xf32, #tpu.memory_space<vmem>>, vector<1x128xf32>
    %50 = vector.broadcast %39 : vector<1x1xf32> to vector<1x128xf32>
    %51 = arith.mulf %50, %49 : vector<1x128xf32>
    %52 = vector.broadcast %42 : vector<16x1xf32> to vector<16x128xf32>
    %53 = arith.mulf %52, %3 : vector<16x128xf32>
    %cst_28 = arith.constant dense<0.000000e+00> : vector<128xf32>
    %54 = vector.multi_reduction <add>, %53, %cst_28 [0] : vector<16x128xf32> to vector<128xf32>
    %55 = vector.shape_cast %54 : vector<128xf32> to vector<1x128xf32>
    %56 = arith.addf %51, %55 : vector<1x128xf32>
    %c0_29 = arith.constant 0 : index
    %c0_30 = arith.constant 0 : index
    %57 = vector.load %arg14[%c0_29, %c0_30] : memref<1x128xf32, #tpu.memory_space<vmem>>, vector<1x128xf32>
    tpu.vector_store %arg14[%c0_29, %c0_30], %56 {strides = array<i32>} : memref<1x128xf32, #tpu.memory_space<vmem>>, vector<1x128xf32>,
    %c0_31 = arith.constant 0 : index
    %c0_32 = arith.constant 0 : index
    %58 = vector.load %arg12[%c0_31, %c0_32] : memref<1x1xf32, #tpu.memory_space<vmem>>, vector<1x1xf32>
    tpu.vector_store %arg12[%c0_31, %c0_32], %37 {strides = array<i32>} : memref<1x1xf32, #tpu.memory_space<vmem>>, vector<1x1xf32>,
    %c3_i32 = arith.constant 3 : i32
    %59 = arith.cmpi eq, %arg0, %c3_i32 : i32
    %60 = arith.extui %59 : i1 to i32
    %c0_i32_33 = arith.constant 0 : i32
    %61 = arith.cmpi ne, %60, %c0_i32_33 : i32
    scf.if %61 {
      %c0_34 = arith.constant 0 : index
      %c0_35 = arith.constant 0 : index
      %62 = vector.load %arg14[%c0_34, %c0_35] : memref<1x128xf32, #tpu.memory_space<vmem>>, vector<1x128xf32>
      %c0_36 = arith.constant 0 : index
      %c0_37 = arith.constant 0 : index
      %63 = vector.load %arg13[%c0_36, %c0_37] : memref<1x1xf32, #tpu.memory_space<vmem>>, vector<1x1xf32>
      %64 = vector.broadcast %63 : vector<1x1xf32> to vector<1x128xf32>
      %65 = arith.divf %62, %64 : vector<1x128xf32>
      %c0_38 = arith.constant 0 : index
      %c0_39 = arith.constant 0 : index
      %66 = vector.load %arg10[%c0_38, %c0_39] : memref<1x128xf32, #tpu.memory_space<vmem>>, vector<1x128xf32>
      tpu.vector_store %arg10[%c0_38, %c0_39], %65 {strides = array<i32>} : memref<1x128xf32, #tpu.memory_space<vmem>>, vector<1x128xf32>,
      %c0_40 = arith.constant 0 : index
      %c0_41 = arith.constant 0 : index
      %67 = vector.load %arg8[%c0_40, %c0_41] : memref<128x4xf32, #tpu.memory_space<vmem>>, vector<128x4xf32>
      %cst_42 = arith.constant dense<0.000000e+00> : vector<1x4xf32>
      %68 = tpu.matmul %65, %67, %cst_42 {dimension_numbers = #tpu.dot_dimension_numbers<[1], [0], [0], [1], [0, 0, 1, 1], [], []>} : vector<1x128xf32>, vector<128x4xf32>, vector<1x4xf32> -> vector<1x4xf32>
      %c0_43 = arith.constant 0 : index
      %c0_44 = arith.constant 0 : index
      %69 = vector.load %arg9[%c0_43, %c0_44] : memref<1x4xf32, #tpu.memory_space<vmem>>, vector<1x4xf32>
      %70 = arith.addf %68, %69 : vector<1x4xf32>
      %c0_45 = arith.constant 0 : index
      %c0_46 = arith.constant 0 : index
      %71 = vector.load %arg11[%c0_45, %c0_46] : memref<1x4xf32, #tpu.memory_space<vmem>>, vector<1x4xf32>
      tpu.vector_store %arg11[%c0_45, %c0_46], %70 {strides = array<i32>} : memref<1x4xf32, #tpu.memory_space<vmem>>, vector<1x4xf32>,
    } else {
    }
    return
  }
  func.func @transform_0(%arg0: i32) -> (i32, i32) {
    %c0_i32 = arith.constant 0 : i32
    %c0_i32_0 = arith.constant 0 : i32
    return %arg0, %c0_i32 : i32, i32
  }
  func.func @transform_1(%arg0: i32) -> (i32, i32) {
    %c0_i32 = arith.constant 0 : i32
    %c0_i32_0 = arith.constant 0 : i32
    %c0_i32_1 = arith.constant 0 : i32
    return %c0_i32, %c0_i32_0 : i32, i32
  }
  func.func @transform_2(%arg0: i32) -> (i32, i32) {
    %c0_i32 = arith.constant 0 : i32
    %c0_i32_0 = arith.constant 0 : i32
    %c0_i32_1 = arith.constant 0 : i32
    return %c0_i32, %c0_i32_0 : i32, i32
  }
  func.func @transform_3(%arg0: i32) -> (i32, i32) {
    %c0_i32 = arith.constant 0 : i32
    %c0_i32_0 = arith.constant 0 : i32
    %c0_i32_1 = arith.constant 0 : i32
    return %c0_i32, %c0_i32_0 : i32, i32
  }
  func.func @transform_4(%arg0: i32) -> (i32, i32) {
    %c0_i32 = arith.constant 0 : i32
    %c0_i32_0 = arith.constant 0 : i32
    %c0_i32_1 = arith.constant 0 : i32
    return %c0_i32, %c0_i32_0 : i32, i32
  }
  func.func @transform_5(%arg0: i32) -> (i32, i32) {
    %c0_i32 = arith.constant 0 : i32
    %c0_i32_0 = arith.constant 0 : i32
    %c0_i32_1 = arith.constant 0 : i32
    return %c0_i32, %c0_i32_0 : i32, i32
  }
  func.func @transform_6(%arg0: i32) -> (i32, i32) {
    %c0_i32 = arith.constant 0 : i32
    %c0_i32_0 = arith.constant 0 : i32
    %c0_i32_1 = arith.constant 0 : i32
    return %c0_i32, %c0_i32_0 : i32, i32
  }
  func.func @transform_7(%arg0: i32) -> (i32, i32) {
    %c0_i32 = arith.constant 0 : i32
    %c0_i32_0 = arith.constant 0 : i32
    %c0_i32_1 = arith.constant 0 : i32
    return %c0_i32, %c0_i32_0 : i32, i32
  }
  func.func @transform_8(%arg0: i32) -> (i32, i32) {
    %c0_i32 = arith.constant 0 : i32
    %c0_i32_0 = arith.constant 0 : i32
    %c0_i32_1 = arith.constant 0 : i32
    return %c0_i32, %c0_i32_0 : i32, i32
  }
  func.func @transform_9(%arg0: i32) -> (i32, i32) {
    %c0_i32 = arith.constant 0 : i32
    %c0_i32_0 = arith.constant 0 : i32
    %c0_i32_1 = arith.constant 0 : i32
    return %c0_i32, %c0_i32_0 : i32, i32
  }
  func.func @transform_10(%arg0: i32) -> (i32, i32) {
    %c0_i32 = arith.constant 0 : i32
    %c0_i32_0 = arith.constant 0 : i32
    %c0_i32_1 = arith.constant 0 : i32
    return %c0_i32, %c0_i32_0 : i32, i32
  }
}

</mosaic_0001>

<llo_original>
// kernel: tpu_custom_call.1
$region0: #{tpu_custom_call.1}
  #allocation0 [shape = 'u32[]', space=smem, size = 0x4, offset = 0x4, fixed_abs, tag = 'smem constant byte address 0x4 - core index']
  #allocation1 [shape = 'u32[144,128]{1,0:T(1,128)}', space=vmem, size = 0x12000, scoped, tag = 'internal scratch']
  #allocation2 [shape = 'f32[1,1]{1,0:T(1,128)}', space=vmem, size = 0x200, scoped, tag = 'scratch operand']
  #allocation3 [shape = 'f32[1,1]{1,0:T(1,128)}', space=vmem, size = 0x200, scoped, tag = 'scratch operand']
  #allocation4 [shape = 'f32[1,128]{1,0:T(1,128)}', space=vmem, size = 0x200, scoped, tag = 'scratch operand']
  #allocation5 [shape = 'f32[1,1]{1,0:T(1,128)S(1)}', space=vmem, size = 0x200, scoped, tag = 'scoped memory for tpu_custom_call.1']
  %s0 = inlined_call_operand.hbm [shape: f32[64,128], index: 0, kind: input, shape index: {}]
  %s1 = inlined_call_operand.vmem [shape: f32[128,128], index: 1, kind: input, shape index: {}]
  %s2 = inlined_call_operand.vmem [shape: f32[1,128], index: 2, kind: input, shape index: {}]
  %s3 = inlined_call_operand.vmem [shape: f32[128,128], index: 3, kind: input, shape index: {}]
  %s4 = inlined_call_operand.vmem [shape: f32[1,128], index: 4, kind: input, shape index: {}]
  %s5 = inlined_call_operand.vmem [shape: f32[128,1], index: 5, kind: input, shape index: {}]
  %s6 = inlined_call_operand.<no memory space> [shape: f32[1,1], index: 6, kind: input, shape index: {}]
  %s7 = inlined_call_operand.vmem [shape: f32[128,4], index: 7, kind: input, shape index: {}]
  %s8 = inlined_call_operand.vmem [shape: f32[1,4], index: 8, kind: input, shape index: {}]
  %s9 = inlined_call_operand.hbm [shape: f32[1,128], index: 9, kind: output, shape index: {0}]
  %s10 = inlined_call_operand.hbm [shape: f32[1,4], index: 10, kind: output, shape index: {1}]
  %11 = xla_tuple %s9, %s10
  %s12 = sld [smem:[#allocation0]]
  $region89: #{tpu_custom_call.1} parent=0
    _
  %s14 = ssub.s32 1, %s12
  %s15 = scalar_select 0, %s14, %s12
  %v16 = vstv %s6
  %17 = vst [vmem:[#allocation5] sm:$0x1] %v16
  $region1: #{tpu_custom_call.1} parent=0
    #allocation6 [shape = 'u8[16384]{0}', space=vmem, size = 0x4000, scoped, tag = 'input window, operand 0']
    #allocation7 [shape = 's32[2]{0}', space=sflag, size = 0x8, scoped, tag = 'scoped memory for tpu_custom_call.1']
    #allocation8 [shape = 's32[2]{0}', space=sflag, size = 0x8, scoped, tag = 'scoped memory for tpu_custom_call.1']
    #allocation9 [shape = 'u8[512]{0}', space=vmem, size = 0x400, scoped, tag = 'output window, operand 0, single buffered']
    #allocation10 [shape = 'u8[512]{0}', space=vmem, size = 0x400, scoped, tag = 'output window, operand 1, single buffered']
    #allocation11 [shape = 's32[1]{0}', space=sflag, size = 0x4, scoped, tag = 'scoped memory for tpu_custom_call.1']
    %18 = vsyncpa [#allocation7], 0
    %s19 = scalar_lea.sflag [#allocation7], 1
    %20 = vsyncpa %s19, 0
    %21 = vsyncpa [#allocation8], 0
    %22 = vsyncpa [#allocation11], 0
    loop: start=0, step=1, limit=6
    $region2: #{tpu_custom_call.1} parent=1 // loop_pre_header
      _
    $region3: #{tpu_custom_call.1} parent=1 // loop_header
      %s24 = sphi 0, %s28
      %p25 = scmp.ge.s32.totalorder %s24, 6
      %s34 = sphi 0, %s36
      %s37 = sphi 0, %s34
      %s38 = sphi 0, %s37
      %s54 = sphi 0, %s38
      %s58 = sphi 0, %s58
      %s60 = sphi 0, %s58
      %s61 = sphi 0, %s60
      %s75 = sphi 0, %s61
      %s79 = sphi 0, %s79
      %s81 = sphi 0, %s79
      %s82 = sphi 0, %s81
      %s96 = sphi 0, %s82
      %s100 = sphi 0, %s100
      %s102 = sphi 0, %s100
      %s103 = sphi 0, %s102
      %s117 = sphi 0, %s103
      %s121 = sphi 0, %s121
      %s123 = sphi 0, %s121
      %s124 = sphi 0, %s123
      %s138 = sphi 0, %s124
      %s142 = sphi 0, %s142
      %s144 = sphi 0, %s142
      %s145 = sphi 0, %s144
      %s159 = sphi 0, %s145
      %s163 = sphi 0, %s163
      %s165 = sphi 0, %s163
      %s166 = sphi 0, %s165
      %s180 = sphi 0, %s166
      %s184 = sphi 0, %s184
      %s186 = sphi 0, %s184
      %s187 = sphi 0, %s186
      %s201 = sphi 0, %s187
      %s205 = sphi 0, %s205
      %s207 = sphi 0, %s205
      %s208 = sphi 0, %s207
      %s222 = sphi 0, %s208
      %s226 = sphi 0, %s226
      %s228 = sphi 0, %s226
      %s229 = sphi 0, %s228
      %s243 = sphi 0, %s229
      %s247 = sphi 0, %s247
      %s249 = sphi 0, %s247
      %s250 = sphi 0, %s249
      %s264 = sphi 0, %s250
    $region4: #{tpu_custom_call.1} parent=1 // loop_header_branch
      %27 = sbr.rel (%p25) target = $region8
    $region5: #{tpu_custom_call.1} parent=1 // loop_body
      %s29 = ssub.s32 %s24, 1
      %s30 = ssub.s32 %s24, 2
      %s31 = sadd.s32 %s24, 1
      %s32 = ssub.s32 %s24, %s31
      %p33 = scmp.eq.s32.totalorder %s32, 0
      %s35 = sadd.s32 %s34, 1
      %s36 = scalar_select %p33, %s34, %s35
      %p39 = pneg %p33
      %p40 = scmp.eq.s32.totalorder %s24, 3
      %p41 = por %p39, %p40
      %p42 = scmp.ne.s32.totalorder %s34, %s37
      %p43 = scmp.eq.s32.totalorder %s24, 0
      %p44 = por %p42, %p43
      %p45 = scmp.ne.s32.totalorder %s34, %s37
      %p46 = scmp.eq.s32.totalorder %s29, 3
      %p47 = por %p45, %p46
      %p48 = scmp.ne.s32.totalorder %s37, %s38
      %p49 = scmp.eq.s32.totalorder %s29, 0
      %p50 = por %p48, %p49
      %p51 = scmp.ne.s32.totalorder %s37, %s38
      %p52 = scmp.eq.s32.totalorder %s30, 3
      %p53 = por %p51, %p52
      %p55 = scmp.ne.s32.totalorder %s38, %s54
      %p56 = scmp.eq.s32.totalorder %s30, 0
      %p57 = por %p55, %p56
      %s59 = sadd.s32 %s58, 1
      %p62 = scmp.eq.s32.totalorder %s24, 3
      %p63 = scmp.ne.s32.totalorder %s58, %s60
      %p64 = scmp.eq.s32.totalorder %s24, 0
      %p65 = por %p63, %p64
      %p66 = scmp.ne.s32.totalorder %s58, %s60
      %p67 = scmp.eq.s32.totalorder %s29, 3
      %p68 = por %p66, %p67
      %p69 = scmp.ne.s32.totalorder %s60, %s61
      %p70 = scmp.eq.s32.totalorder %s29, 0
      %p71 = por %p69, %p70
      %p72 = scmp.ne.s32.totalorder %s60, %s61
      %p73 = scmp.eq.s32.totalorder %s30, 3
      %p74 = por %p72, %p73
      %p76 = scmp.ne.s32.totalorder %s61, %s75
      %p77 = scmp.eq.s32.totalorder %s30, 0
      %p78 = por %p76, %p77
      %s80 = sadd.s32 %s79, 1
      %p83 = scmp.eq.s32.totalorder %s24, 3
      %p84 = scmp.ne.s32.totalorder %s79, %s81
      %p85 = scmp.eq.s32.totalorder %s24, 0
      %p86 = por %p84, %p85
      %p87 = scmp.ne.s32.totalorder %s79, %s81
      %p88 = scmp.eq.s32.totalorder %s29, 3
      %p89 = por %p87, %p88
      %p90 = scmp.ne.s32.totalorder %s81, %s82
      %p91 = scmp.eq.s32.totalorder %s29, 0
      %p92 = por %p90, %p91
      %p93 = scmp.ne.s32.totalorder %s81, %s82
      %p94 = scmp.eq.s32.totalorder %s30, 3
      %p95 = por %p93, %p94
      %p97 = scmp.ne.s32.totalorder %s82, %s96
      %p98 = scmp.eq.s32.totalorder %s30, 0
      %p99 = por %p97, %p98
      %s101 = sadd.s32 %s100, 1
      %p104 = scmp.eq.s32.totalorder %s24, 3
      %p105 = scmp.ne.s32.totalorder %s100, %s102
      %p106 = scmp.eq.s32.totalorder %s24, 0
      %p107 = por %p105, %p106
      %p108 = scmp.ne.s32.totalorder %s100, %s102
      %p109 = scmp.eq.s32.totalorder %s29, 3
      %p110 = por %p108, %p109
      %p111 = scmp.ne.s32.totalorder %s102, %s103
      %p112 = scmp.eq.s32.totalorder %s29, 0
      %p113 = por %p111, %p112
      %p114 = scmp.ne.s32.totalorder %s102, %s103
      %p115 = scmp.eq.s32.totalorder %s30, 3
      %p116 = por %p114, %p115
      %p118 = scmp.ne.s32.totalorder %s103, %s117
      %p119 = scmp.eq.s32.totalorder %s30, 0
      %p120 = por %p118, %p119
      %s122 = sadd.s32 %s121, 1
      %p125 = scmp.eq.s32.totalorder %s24, 3
      %p126 = scmp.ne.s32.totalorder %s121, %s123
      %p127 = scmp.eq.s32.totalorder %s24, 0
      %p128 = por %p126, %p127
      %p129 = scmp.ne.s32.totalorder %s121, %s123
      %p130 = scmp.eq.s32.totalorder %s29, 3
      %p131 = por %p129, %p130
      %p132 = scmp.ne.s32.totalorder %s123, %s124
      %p133 = scmp.eq.s32.totalorder %s29, 0
      %p134 = por %p132, %p133
      %p135 = scmp.ne.s32.totalorder %s123, %s124
      %p136 = scmp.eq.s32.totalorder %s30, 3
      %p137 = por %p135, %p136
      %p139 = scmp.ne.s32.totalorder %s124, %s138
      %p140 = scmp.eq.s32.totalorder %s30, 0
      %p141 = por %p139, %p140
      %s143 = sadd.s32 %s142, 1
      %p146 = scmp.eq.s32.totalorder %s24, 3
      %p147 = scmp.ne.s32.totalorder %s142, %s144
      %p148 = scmp.eq.s32.totalorder %s24, 0
      %p149 = por %p147, %p148
      %p150 = scmp.ne.s32.totalorder %s142, %s144
      %p151 = scmp.eq.s32.totalorder %s29, 3
      %p152 = por %p150, %p151
      %p153 = scmp.ne.s32.totalorder %s144, %s145
      %p154 = scmp.eq.s32.totalorder %s29, 0
      %p155 = por %p153, %p154
      %p156 = scmp.ne.s32.totalorder %s144, %s145
      %p157 = scmp.eq.s32.totalorder %s30, 3
      %p158 = por %p156, %p157
      %p160 = scmp.ne.s32.totalorder %s145, %s159
      %p161 = scmp.eq.s32.totalorder %s30, 0
      %p162 = por %p160, %p161
      %s164 = sadd.s32 %s163, 1
      %p167 = scmp.eq.s32.totalorder %s24, 3
      %p168 = scmp.ne.s32.totalorder %s163, %s165
      %p169 = scmp.eq.s32.totalorder %s24, 0
      %p170 = por %p168, %p169
      %p171 = scmp.ne.s32.totalorder %s163, %s165
      %p172 = scmp.eq.s32.totalorder %s29, 3
      %p173 = por %p171, %p172
      %p174 = scmp.ne.s32.totalorder %s165, %s166
      %p175 = scmp.eq.s32.totalorder %s29, 0
      %p176 = por %p174, %p175
      %p177 = scmp.ne.s32.totalorder %s165, %s166
      %p178 = scmp.eq.s32.totalorder %s30, 3
      %p179 = por %p177, %p178
      %p181 = scmp.ne.s32.totalorder %s166, %s180
      %p182 = scmp.eq.s32.totalorder %s30, 0
      %p183 = por %p181, %p182
      %s185 = sadd.s32 %s184, 1
      %p188 = scmp.eq.s32.totalorder %s24, 3
      %p189 = scmp.ne.s32.totalorder %s184, %s186
      %p190 = scmp.eq.s32.totalorder %s24, 0
      %p191 = por %p189, %p190
      %p192 = scmp.ne.s32.totalorder %s184, %s186
      %p193 = scmp.eq.s32.totalorder %s29, 3
      %p194 = por %p192, %p193
      %p195 = scmp.ne.s32.totalorder %s186, %s187
      %p196 = scmp.eq.s32.totalorder %s29, 0
      %p197 = por %p195, %p196
      %p198 = scmp.ne.s32.totalorder %s186, %s187
      %p199 = scmp.eq.s32.totalorder %s30, 3
      %p200 = por %p198, %p199
      %p202 = scmp.ne.s32.totalorder %s187, %s201
      %p203 = scmp.eq.s32.totalorder %s30, 0
      %p204 = por %p202, %p203
      %s206 = sadd.s32 %s205, 1
      %p209 = scmp.eq.s32.totalorder %s24, 3
      %p210 = scmp.ne.s32.totalorder %s205, %s207
      %p211 = scmp.eq.s32.totalorder %s24, 0
      %p212 = por %p210, %p211
      %p213 = scmp.ne.s32.totalorder %s205, %s207
      %p214 = scmp.eq.s32.totalorder %s29, 3
      %p215 = por %p213, %p214
      %p216 = scmp.ne.s32.totalorder %s207, %s208
      %p217 = scmp.eq.s32.totalorder %s29, 0
      %p218 = por %p216, %p217
      %p219 = scmp.ne.s32.totalorder %s207, %s208
      %p220 = scmp.eq.s32.totalorder %s30, 3
      %p221 = por %p219, %p220
      %p223 = scmp.ne.s32.totalorder %s208, %s222
      %p224 = scmp.eq.s32.totalorder %s30, 0
      %p225 = por %p223, %p224
      %s227 = sadd.s32 %s226, 1
      %p230 = scmp.eq.s32.totalorder %s24, 3
      %p231 = scmp.ne.s32.totalorder %s226, %s228
      %p232 = scmp.eq.s32.totalorder %s24, 0
      %p233 = por %p231, %p232
      %p234 = scmp.ne.s32.totalorder %s226, %s228
      %p235 = scmp.eq.s32.totalorder %s29, 3
      %p236 = por %p234, %p235
      %p237 = scmp.ne.s32.totalorder %s228, %s229
      %p238 = scmp.eq.s32.totalorder %s29, 0
      %p239 = por %p237, %p238
      %p240 = scmp.ne.s32.totalorder %s228, %s229
      %p241 = scmp.eq.s32.totalorder %s30, 3
      %p242 = por %p240, %p241
      %p244 = scmp.ne.s32.totalorder %s229, %s243
      %p245 = scmp.eq.s32.totalorder %s30, 0
      %p246 = por %p244, %p245
      %s248 = sadd.s32 %s247, 1
      %p251 = scmp.eq.s32.totalorder %s24, 3
      %p252 = scmp.ne.s32.totalorder %s247, %s249
      %p253 = scmp.eq.s32.totalorder %s24, 0
      %p254 = por %p252, %p253
      %p255 = scmp.ne.s32.totalorder %s247, %s249
      %p256 = scmp.eq.s32.totalorder %s29, 3
      %p257 = por %p255, %p256
      %p258 = scmp.ne.s32.totalorder %s249, %s250
      %p259 = scmp.eq.s32.totalorder %s29, 0
      %p260 = por %p258, %p259
      %p261 = scmp.ne.s32.totalorder %s249, %s250
      %p262 = scmp.eq.s32.totalorder %s30, 3
      %p263 = por %p261, %p262
      %p265 = scmp.ne.s32.totalorder %s250, %s264
      %p266 = scmp.eq.s32.totalorder %s30, 0
      %p267 = por %p265, %p266
      %p268 = scmp.le.s32.totalorder 1, %s24
      %p269 = scmp.lt.s32.totalorder %s24, 5
      %p270 = pnand %p268, %p269
      %p271 = pneg %p270
      // Predicated region
      $region9: #{tpu_custom_call.1} parent=5 // pred_check
        _
      $region10: #{tpu_custom_call.1} parent=5 // pred_check_branch
        %273 = sbr.rel (%p270) target = $region12
      $region11: #{tpu_custom_call.1} parent=5 // pred_region
        %s274 = ssub.s32 %s24, 1
        // Predicated region
        $region13: #{tpu_custom_call.1} parent=11 // pred_check
          %p275 = pneg %p71
        $region14: #{tpu_custom_call.1} parent=11 // pred_check_branch
          %277 = sbr.rel (%p275) target = $region16
        $region15: #{tpu_custom_call.1} parent=11 // pred_region
          _
        $region16: #{tpu_custom_call.1} parent=11 // pred_fallthru
          _
        // Predicated region
        $region17: #{tpu_custom_call.1} parent=11 // pred_check
          %p278 = pneg %p92
        $region18: #{tpu_custom_call.1} parent=11 // pred_check_branch
          %280 = sbr.rel (%p278) target = $region20
        $region19: #{tpu_custom_call.1} parent=11 // pred_region
          _
        $region20: #{tpu_custom_call.1} parent=11 // pred_fallthru
          _
        // Predicated region
        $region21: #{tpu_custom_call.1} parent=11 // pred_check
          %p281 = pneg %p113
        $region22: #{tpu_custom_call.1} parent=11 // pred_check_branch
          %283 = sbr.rel (%p281) target = $region24
        $region23: #{tpu_custom_call.1} parent=11 // pred_region
          _
        $region24: #{tpu_custom_call.1} parent=11 // pred_fallthru
          _
        // Predicated region
        $region25: #{tpu_custom_call.1} parent=11 // pred_check
          %p284 = pneg %p134
        $region26: #{tpu_custom_call.1} parent=11 // pred_check_branch
          %286 = sbr.rel (%p284) target = $region28
        $region27: #{tpu_custom_call.1} parent=11 // pred_region
          _
        $region28: #{tpu_custom_call.1} parent=11 // pred_fallthru
          _
        // Predicated region
        $region29: #{tpu_custom_call.1} parent=11 // pred_check
          %p287 = pneg %p155
        $region30: #{tpu_custom_call.1} parent=11 // pred_check_branch
          %289 = sbr.rel (%p287) target = $region32
        $region31: #{tpu_custom_call.1} parent=11 // pred_region
          _
        $region32: #{tpu_custom_call.1} parent=11 // pred_fallthru
          _
        // Predicated region
        $region33: #{tpu_custom_call.1} parent=11 // pred_check
          %p290 = pneg %p176
        $region34: #{tpu_custom_call.1} parent=11 // pred_check_branch
          %292 = sbr.rel (%p290) target = $region36
        $region35: #{tpu_custom_call.1} parent=11 // pred_region
          _
        $region36: #{tpu_custom_call.1} parent=11 // pred_fallthru
          _
        // Predicated region
        $region37: #{tpu_custom_call.1} parent=11 // pred_check
          %p293 = pneg %p197
        $region38: #{tpu_custom_call.1} parent=11 // pred_check_branch
          %295 = sbr.rel (%p293) target = $region40
        $region39: #{tpu_custom_call.1} parent=11 // pred_region
          _
        $region40: #{tpu_custom_call.1} parent=11 // pred_fallthru
          _
        // Predicated region
        $region41: #{tpu_custom_call.1} parent=11 // pred_check
          %p296 = pneg %p218
        $region42: #{tpu_custom_call.1} parent=11 // pred_check_branch
          %298 = sbr.rel (%p296) target = $region44
        $region43: #{tpu_custom_call.1} parent=11 // pred_region
          _
        $region44: #{tpu_custom_call.1} parent=11 // pred_fallthru
          _
      $region12: #{tpu_custom_call.1} parent=5 // pred_fallthru
        _
      %p299 = scmp.lt.s32.totalorder %s24, 4
      // Predicated region
      $region45: #{tpu_custom_call.1} parent=5 // pred_check
        %p300 = pneg %p299
      $region46: #{tpu_custom_call.1} parent=5 // pred_check_branch
        %302 = sbr.rel (%p300) target = $region48
      $region47: #{tpu_custom_call.1} parent=5 // pred_region
        // Predicated region
        $region49: #{tpu_custom_call.1} parent=47 // pred_check
          %p303 = pneg %p44
        $region50: #{tpu_custom_call.1} parent=47 // pred_check_branch
          %305 = sbr.rel (%p303) target = $region52
        $region51: #{tpu_custom_call.1} parent=47 // pred_region
          %s306 = sand.u32 %s34, 1
          %s307 = scalar_lea.sflag [#allocation7], %s306
          %s308 = sand.u32 %s34, 1
          %s309 = smul.addr %s308, 16
          %s310 = scalar_lea.vmem [#allocation6], %s309
          %s311 = smul.u32 2, %s24
          %s313 = ssub.s32 256, 256
          %314 = vsyncadd %s307, %s313
          %s315 = smul.addr %s311, 128
          %s316 = scalar_lea.hbm %s0, %s315
          %s317 = sshll.u32 %s310, 4
          %s318 = int_to_ptr.vmem [resolvable:$true] %s317
          %323 = dma.hbm_to_vmem [thread:$0]  %s316, 256, %s318, %s307, 128, 128, 8
        $region52: #{tpu_custom_call.1} parent=47 // pred_fallthru
          _
      $region48: #{tpu_custom_call.1} parent=5 // pred_fallthru
        _
      %p324 = scmp.le.s32.totalorder 1, %s24
      %p325 = scmp.lt.s32.totalorder %s24, 5
      %p326 = pnand %p324, %p325
      %p327 = pneg %p326
      // Predicated region
      $region53: #{tpu_custom_call.1} parent=5 // pred_check
        _
      $region54: #{tpu_custom_call.1} parent=5 // pred_check_branch
        %329 = sbr.rel (%p326) target = $region56
      $region55: #{tpu_custom_call.1} parent=5 // pred_region
        %s330 = ssub.s32 %s24, 1
        %s331 = sand.u32 %s37, 1
        %s332 = scalar_lea.sflag [#allocation7], %s331
        %s333 = sand.u32 %s37, 1
        %s334 = smul.addr %s333, 16
        %s335 = scalar_lea.vmem [#allocation6], %s334
        // Predicated region
        $region57: #{tpu_custom_call.1} parent=55 // pred_check
          %p336 = pneg %p50
        $region58: #{tpu_custom_call.1} parent=55 // pred_check_branch
          %338 = sbr.rel (%p336) target = $region60
        $region59: #{tpu_custom_call.1} parent=55 // pred_region
          %339 = dma.done %s332, 256
        $region60: #{tpu_custom_call.1} parent=55 // pred_fallthru
          _
        %s340 = sand.u32 %s37, 1
        %s341 = scalar_lea.sflag [#allocation7], %s340
        %s342 = sand.u32 %s37, 1
        %s343 = smul.addr %s342, 16
        %s344 = scalar_lea.vmem [#allocation6], %s343
        %p345 = pneg %p50
        %p346 = pneg %p47
        %p347 = pneg %p71
        %p348 = pneg %p68
        %p349 = pneg %p92
        %p350 = pneg %p89
        %p351 = pneg %p113
        %p352 = pneg %p110
        %p353 = pneg %p134
        %p354 = pneg %p131
        %p355 = pneg %p155
        %p356 = pneg %p152
        %p357 = pneg %p176
        %p358 = pneg %p173
        %p359 = pneg %p197
        %p360 = pneg %p194
        %p361 = pneg %p218
        %p362 = pneg %p215
        %p363 = pneg %p239
        %p364 = pneg %p236
        %p365 = pneg %p260
        %p366 = pneg %p257
        %s367 = smul.u32 2, %s29
        %p368 = scmp.eq.s32.totalorder %s29, 0
        // Predicated region
        $region61: #{tpu_custom_call.1} parent=55 // pred_check
          %p369 = pneg %p368
        $region62: #{tpu_custom_call.1} parent=55 // pred_check_branch
          %371 = sbr.rel (%p369) target = $region64
        $region63: #{tpu_custom_call.1} parent=55 // pred_region
          %vm372 = vcmask 0
          %373 = vst.msk [vmem:[#allocation2] sm:$0x1] %vm372, -1e+30
          %374 = vst.msk [vmem:[#allocation3] sm:$0x1] %vm372, 0.0
          %375 = vst [vmem:[#allocation4] sm:$0x1] 0.0
        $region64: #{tpu_custom_call.1} parent=55 // pred_fallthru
          _
        %v376 = vld [vmem:[%s335] sm:$0xff]
        %v377 = vld [vmem:[%s335 + $0x8] sm:$0xff]
        %v378 = vld [vmem:[%s1] sm:$0xff]
        %v379 = vld [vmem:[%s1 + $0x8] sm:$0xff]
        %v380 = vld [vmem:[%s1 + $0x10] sm:$0xff]
        %v381 = vld [vmem:[%s1 + $0x18] sm:$0xff]
        %v382 = vld [vmem:[%s1 + $0x20] sm:$0xff]
        %v383 = vld [vmem:[%s1 + $0x28] sm:$0xff]
        %v384 = vld [vmem:[%s1 + $0x30] sm:$0xff]
        %v385 = vld [vmem:[%s1 + $0x38] sm:$0xff]
        %v386 = vld [vmem:[%s1 + $0x40] sm:$0xff]
        %v387 = vld [vmem:[%s1 + $0x48] sm:$0xff]
        %v388 = vld [vmem:[%s1 + $0x50] sm:$0xff]
        %v389 = vld [vmem:[%s1 + $0x58] sm:$0xff]
        %v390 = vld [vmem:[%s1 + $0x60] sm:$0xff]
        %v391 = vld [vmem:[%s1 + $0x68] sm:$0xff]
        %v392 = vld [vmem:[%s1 + $0x70] sm:$0xff]
        %v393 = vld [vmem:[%s1 + $0x78] sm:$0xff]
        %v394 = vld [vmem:[%s2] sm:$0x1]
        %v396 = vlaneseq
        %v397 = vshrl.u32 %v396, 7
        %v398 = vsub.s32 0, %v397
        %v399 = vrot.slane %v394, %v398
        %401 = vmatprep.subr.mxu0 0.0
        %402 = vmatpush1.msra.mxu0 %v393
        %403 = vmatprep.subr.mxu0 0.0
        %404 = vmatpush1.msra.mxu0 %v392
        %405 = vmatprep.subr.mxu0 0.0
        %406 = vmatpush1.msra.mxu0 %v391
        %407 = vmatprep.subr.mxu0 0.0
        %408 = vmatpush1.msra.mxu0 %v390
        %409 = vmatprep.subr.mxu0 0.0
        %410 = vmatpush1.msra.mxu0 %v389
        %411 = vmatprep.subr.mxu0 0.0
        %412 = vmatpush1.msra.mxu0 %v388
        %413 = vmatprep.subr.mxu0 0.0
        %414 = vmatpush1.msra.mxu0 %v387
        %415 = vmatprep.subr.mxu0 0.0
        %416 = vmatpush1.msra.mxu0 %v386
        %417 = vmatprep.subr.mxu0 0.0
        %418 = vmatpush1.msra.mxu0 %v385
        %419 = vmatprep.subr.mxu0 0.0
        %420 = vmatpush1.msra.mxu0 %v384
        %421 = vmatprep.subr.mxu0 0.0
        %422 = vmatpush1.msra.mxu0 %v383
        %423 = vmatprep.subr.mxu0 0.0
        %424 = vmatpush1.msra.mxu0 %v382
        %425 = vmatprep.subr.mxu0 0.0
        %426 = vmatpush1.msra.mxu0 %v381
        %427 = vmatprep.subr.mxu0 0.0
        %428 = vmatpush1.msra.mxu0 %v380
        %429 = vmatprep.subr.mxu0 0.0
        %430 = vmatpush1.msra.mxu0 %v379
        %431 = vmatprep.subr.mxu0 0.0
        %432 = vmatpush1.msra.mxu0 %v378
        %433 = vmatprep.subr.mxu0 0.0
        %434 = vmatpush2.msra.mxu0 0.0
        %435 = vmatprep.subr.mxu0 0.0
        %436 = vmatpush2.msra.mxu0 0.0
        %437 = vmatprep.subr.mxu0 0.0
        %438 = vmatpush2.msra.mxu0 0.0
        %439 = vmatprep.subr.mxu0 0.0
        %440 = vmatpush2.msra.mxu0 0.0
        %441 = vmatprep.subr.mxu0 0.0
        %442 = vmatpush2.msra.mxu0 0.0
        %443 = vmatprep.subr.mxu0 0.0
        %444 = vmatpush2.msra.mxu0 0.0
        %445 = vmatprep.subr.mxu0 0.0
        %446 = vmatpush2.msra.mxu0 0.0
        %447 = vmatprep.subr.mxu0 0.0
        %448 = vmatpush2.msra.mxu0 0.0
        %449 = vmatprep.subr.mxu0 0.0
        %450 = vmatpush2.msra.mxu0 0.0
        %451 = vmatprep.subr.mxu0 0.0
        %452 = vmatpush2.msra.mxu0 0.0
        %453 = vmatprep.subr.mxu0 0.0
        %454 = vmatpush2.msra.mxu0 0.0
        %455 = vmatprep.subr.mxu0 0.0
        %456 = vmatpush2.msra.mxu0 0.0
        %457 = vmatprep.subr.mxu0 0.0
        %458 = vmatpush2.msra.mxu0 0.0
        %459 = vmatprep.subr.mxu0 0.0
        %460 = vmatpush2.msra.mxu0 0.0
        %461 = vmatprep.subr.mxu0 0.0
        %462 = vmatpush2.msra.mxu0 0.0
        %463 = vmatprep.subr.mxu0 0.0
        %464 = vmatpush2.msra.mxu0 0.0
        %465 = vmatprep.mubr.f32.mxu0 0.0
        %466 = vmatmul.mubr.f32.gmra.mxu0 %v376
        %v467 = vpop.f32.mrf.mxu0
        %v468 = vadd.f32 %v399, %v467
        %v469 = vpop.f32.mrf.mxu0
        %470 = vmatprep.mubr.f32.mxu0 0.0
        %471 = vmatmul.mubr.f32.gmra.mxu0 %v377
        %v472 = vpop.f32.mrf.mxu0
        %v473 = vadd.f32 %v399, %v472
        %v474 = vpop.f32.mrf.mxu0
        %475 = vdwg.mxu0
        %v476 = vtanh.pop %v468
        %v477 = vtanh.pop %v473
        %v478 = vld [vmem:[%s3] sm:$0xff]
        %v479 = vld [vmem:[%s3 + $0x8] sm:$0xff]
        %v480 = vld [vmem:[%s3 + $0x10] sm:$0xff]
        %v481 = vld [vmem:[%s3 + $0x18] sm:$0xff]
        %v482 = vld [vmem:[%s3 + $0x20] sm:$0xff]
        %v483 = vld [vmem:[%s3 + $0x28] sm:$0xff]
        %v484 = vld [vmem:[%s3 + $0x30] sm:$0xff]
        %v485 = vld [vmem:[%s3 + $0x38] sm:$0xff]
        %v486 = vld [vmem:[%s3 + $0x40] sm:$0xff]
        %v487 = vld [vmem:[%s3 + $0x48] sm:$0xff]
        %v488 = vld [vmem:[%s3 + $0x50] sm:$0xff]
        %v489 = vld [vmem:[%s3 + $0x58] sm:$0xff]
        %v490 = vld [vmem:[%s3 + $0x60] sm:$0xff]
        %v491 = vld [vmem:[%s3 + $0x68] sm:$0xff]
        %v492 = vld [vmem:[%s3 + $0x70] sm:$0xff]
        %v493 = vld [vmem:[%s3 + $0x78] sm:$0xff]
        %v494 = vld [vmem:[%s4] sm:$0x1]
        %v496 = vlaneseq
        %v497 = vshrl.u32 %v496, 7
        %v498 = vsub.s32 0, %v497
        %v499 = vrot.slane %v494, %v498
        %501 = vmatprep.subr.mxu0 0.0
        %502 = vmatpush1.msra.mxu0 %v493
        %503 = vmatprep.subr.mxu0 0.0
        %504 = vmatpush1.msra.mxu0 %v492
        %505 = vmatprep.subr.mxu0 0.0
        %506 = vmatpush1.msra.mxu0 %v491
        %507 = vmatprep.subr.mxu0 0.0
        %508 = vmatpush1.msra.mxu0 %v490
        %509 = vmatprep.subr.mxu0 0.0
        %510 = vmatpush1.msra.mxu0 %v489
        %511 = vmatprep.subr.mxu0 0.0
        %512 = vmatpush1.msra.mxu0 %v488
        %513 = vmatprep.subr.mxu0 0.0
        %514 = vmatpush1.msra.mxu0 %v487
        %515 = vmatprep.subr.mxu0 0.0
        %516 = vmatpush1.msra.mxu0 %v486
        %517 = vmatprep.subr.mxu0 0.0
        %518 = vmatpush1.msra.mxu0 %v485
        %519 = vmatprep.subr.mxu0 0.0
        %520 = vmatpush1.msra.mxu0 %v484
        %521 = vmatprep.subr.mxu0 0.0
        %522 = vmatpush1.msra.mxu0 %v483
        %523 = vmatprep.subr.mxu0 0.0
        %524 = vmatpush1.msra.mxu0 %v482
        %525 = vmatprep.subr.mxu0 0.0
        %526 = vmatpush1.msra.mxu0 %v481
        %527 = vmatprep.subr.mxu0 0.0
        %528 = vmatpush1.msra.mxu0 %v480
        %529 = vmatprep.subr.mxu0 0.0
        %530 = vmatpush1.msra.mxu0 %v479
        %531 = vmatprep.subr.mxu0 0.0
        %532 = vmatpush1.msra.mxu0 %v478
        %533 = vmatprep.subr.mxu0 0.0
        %534 = vmatpush2.msra.mxu0 0.0
        %535 = vmatprep.subr.mxu0 0.0
        %536 = vmatpush2.msra.mxu0 0.0
        %537 = vmatprep.subr.mxu0 0.0
        %538 = vmatpush2.msra.mxu0 0.0
        %539 = vmatprep.subr.mxu0 0.0
        %540 = vmatpush2.msra.mxu0 0.0
        %541 = vmatprep.subr.mxu0 0.0
        %542 = vmatpush2.msra.mxu0 0.0
        %543 = vmatprep.subr.mxu0 0.0
        %544 = vmatpush2.msra.mxu0 0.0
        %545 = vmatprep.subr.mxu0 0.0
        %546 = vmatpush2.msra.mxu0 0.0
        %547 = vmatprep.subr.mxu0 0.0
        %548 = vmatpush2.msra.mxu0 0.0
        %549 = vmatprep.subr.mxu0 0.0
        %550 = vmatpush2.msra.mxu0 0.0
        %551 = vmatprep.subr.mxu0 0.0
        %552 = vmatpush2.msra.mxu0 0.0
        %553 = vmatprep.subr.mxu0 0.0
        %554 = vmatpush2.msra.mxu0 0.0
        %555 = vmatprep.subr.mxu0 0.0
        %556 = vmatpush2.msra.mxu0 0.0
        %557 = vmatprep.subr.mxu0 0.0
        %558 = vmatpush2.msra.mxu0 0.0
        %559 = vmatprep.subr.mxu0 0.0
        %560 = vmatpush2.msra.mxu0 0.0
        %561 = vmatprep.subr.mxu0 0.0
        %562 = vmatpush2.msra.mxu0 0.0
        %563 = vmatprep.subr.mxu0 0.0
        %564 = vmatpush2.msra.mxu0 0.0
        %565 = vmatprep.mubr.f32.mxu0 0.0
        %566 = vmatmul.mubr.f32.gmra.mxu0 %v376
        %v567 = vpop.f32.mrf.mxu0
        %v568 = vadd.f32 %v499, %v567
        %v569 = vpop.f32.mrf.mxu0
        %570 = vmatprep.mubr.f32.mxu0 0.0
        %571 = vmatmul.mubr.f32.gmra.mxu0 %v377
        %v572 = vpop.f32.mrf.mxu0
        %v573 = vadd.f32 %v499, %v572
        %v574 = vpop.f32.mrf.mxu0
        %575 = vdwg.mxu0
        %v576 = vxor.u32 %v568, 2147483648
        %v577 = vxor.u32 %v573, 2147483648
        %v578 = vmul.f32 %v576, 1.442695
        %v579 = vpow.pop %v578
        %v580 = vmul.f32 %v577, 1.442695
        %v581 = vpow.pop %v580
        %v582 = vadd.f32 %v579, 1.0
        %v583 = vadd.f32 %v581, 1.0
        %v584 = vrcp.pop %v582
        %v585 = vmul.f32 1.0, %v584
        %v586 = vrcp.pop %v583
        %v587 = vmul.f32 1.0, %v586
        %v588 = vmul.f32 %v476, %v585
        %v589 = vmul.f32 %v477, %v587
        %v590 = vld [vmem:[%s5] sm:$0xff]
        %v591 = vld [vmem:[%s5 + $0x8] sm:$0xff]
        %v592 = vld [vmem:[%s5 + $0x10] sm:$0xff]
        %v593 = vld [vmem:[%s5 + $0x18] sm:$0xff]
        %v594 = vld [vmem:[%s5 + $0x20] sm:$0xff]
        %v595 = vld [vmem:[%s5 + $0x28] sm:$0xff]
        %v596 = vld [vmem:[%s5 + $0x30] sm:$0xff]
        %v597 = vld [vmem:[%s5 + $0x38] sm:$0xff]
        %v598 = vld [vmem:[%s5 + $0x40] sm:$0xff]
        %v599 = vld [vmem:[%s5 + $0x48] sm:$0xff]
        %v600 = vld [vmem:[%s5 + $0x50] sm:$0xff]
        %v601 = vld [vmem:[%s5 + $0x58] sm:$0xff]
        %v602 = vld [vmem:[%s5 + $0x60] sm:$0xff]
        %v603 = vld [vmem:[%s5 + $0x68] sm:$0xff]
        %v604 = vld [vmem:[%s5 + $0x70] sm:$0xff]
        %v605 = vld [vmem:[%s5 + $0x78] sm:$0xff]
        %v606 = vld [vmem:[#allocation5] sm:$0x1]
        %v608 = vlaneseq
        %v609 = vshrl.u32 %v608, 7
        %v610 = vsub.s32 0, %v609
        %v611 = vrot.slane %v606, %v610
        %613 = vmatprep.subr.mxu0 0.0
        %614 = vmatpush1.msra.mxu0 %v605
        %615 = vmatprep.subr.mxu0 0.0
        %616 = vmatpush1.msra.mxu0 %v604
        %617 = vmatprep.subr.mxu0 0.0
        %618 = vmatpush1.msra.mxu0 %v603
        %619 = vmatprep.subr.mxu0 0.0
        %620 = vmatpush1.msra.mxu0 %v602
        %621 = vmatprep.subr.mxu0 0.0
        %622 = vmatpush1.msra.mxu0 %v601
        %623 = vmatprep.subr.mxu0 0.0
        %624 = vmatpush1.msra.mxu0 %v600
        %625 = vmatprep.subr.mxu0 0.0
        %626 = vmatpush1.msra.mxu0 %v599
        %627 = vmatprep.subr.mxu0 0.0
        %628 = vmatpush1.msra.mxu0 %v598
        %629 = vmatprep.subr.mxu0 0.0
        %630 = vmatpush1.msra.mxu0 %v597
        %631 = vmatprep.subr.mxu0 0.0
        %632 = vmatpush1.msra.mxu0 %v596
        %633 = vmatprep.subr.mxu0 0.0
        %634 = vmatpush1.msra.mxu0 %v595
        %635 = vmatprep.subr.mxu0 0.0
        %636 = vmatpush1.msra.mxu0 %v594
        %637 = vmatprep.subr.mxu0 0.0
        %638 = vmatpush1.msra.mxu0 %v593
        %639 = vmatprep.subr.mxu0 0.0
        %640 = vmatpush1.msra.mxu0 %v592
        %641 = vmatprep.subr.mxu0 0.0
        %642 = vmatpush1.msra.mxu0 %v591
        %643 = vmatprep.subr.mxu0 0.0
        %644 = vmatpush1.msra.mxu0 %v590
        %645 = vmatprep.subr.mxu0 0.0
        %646 = vmatpush2.msra.mxu0 0.0
        %647 = vmatprep.subr.mxu0 0.0
        %648 = vmatpush2.msra.mxu0 0.0
        %649 = vmatprep.subr.mxu0 0.0
        %650 = vmatpush2.msra.mxu0 0.0
        %651 = vmatprep.subr.mxu0 0.0
        %652 = vmatpush2.msra.mxu0 0.0
        %653 = vmatprep.subr.mxu0 0.0
        %654 = vmatpush2.msra.mxu0 0.0
        %655 = vmatprep.subr.mxu0 0.0
        %656 = vmatpush2.msra.mxu0 0.0
        %657 = vmatprep.subr.mxu0 0.0
        %658 = vmatpush2.msra.mxu0 0.0
        %659 = vmatprep.subr.mxu0 0.0
        %660 = vmatpush2.msra.mxu0 0.0
        %661 = vmatprep.subr.mxu0 0.0
        %662 = vmatpush2.msra.mxu0 0.0
        %663 = vmatprep.subr.mxu0 0.0
        %664 = vmatpush2.msra.mxu0 0.0
        %665 = vmatprep.subr.mxu0 0.0
        %666 = vmatpush2.msra.mxu0 0.0
        %667 = vmatprep.subr.mxu0 0.0
        %668 = vmatpush2.msra.mxu0 0.0
        %669 = vmatprep.subr.mxu0 0.0
        %670 = vmatpush2.msra.mxu0 0.0
        %671 = vmatprep.subr.mxu0 0.0
        %672 = vmatpush2.msra.mxu0 0.0
        %673 = vmatprep.subr.mxu0 0.0
        %674 = vmatpush2.msra.mxu0 0.0
        %675 = vmatprep.subr.mxu0 0.0
        %676 = vmatpush2.msra.mxu0 0.0
        %677 = vmatprep.mubr.f32.mxu0 0.0
        %678 = vmatmul.mubr.f32.gmra.mxu0 %v588
        %v679 = vpop.f32.mrf.mxu0
        %v680 = vadd.f32 %v611, %v679
        %v681 = vpop.f32.mrf.mxu0
        %682 = vmatprep.mubr.f32.mxu0 0.0
        %683 = vmatmul.mubr.f32.gmra.mxu0 %v589
        %v684 = vpop.f32.mrf.mxu0
        %v685 = vadd.f32 %v611, %v684
        %v686 = vpop.f32.mrf.mxu0
        %687 = vdwg.mxu0
        %s688 = smul.u32 %s29, 16
        %v689 = vlaneseq
        %v690 = vshrl.u32 %v689, 7
        %v691 = vadd.s32 %v690, 8
        %v692 = vstv %s688
        %v693 = vadd.s32 %v692, %v690
        %v694 = vadd.s32 %v692, %v691
        %vm695 = vcmp.lt.s32.totalorder %v693, 50
        %vm696 = vcmp.lt.s32.totalorder %v694, 50
        %v697 = vsel %vm695, %v680, -1e+30
        %v698 = vsel %vm696, %v685, -1e+30
        %v699 = vld [vmem:[#allocation2] sm:$0x1]
        %vm700 = vcmask 7168
        %v701 = vsel %vm700, %v697, -inf
        %v702 = vsel %vm700, %v698, -inf
        %v703 = vmax.f32 %v701, %v702
        %v704 = vrot.slane %v703, 4
        %v705 = vmax.f32 %v703, %v704
        %v706 = vrot.slane %v705, 2
        %v707 = vmax.f32 %v705, %v706
        %v708 = vrot.slane %v707, 1
        %v709 = vmax.f32 %v707, %v708
        %v710 = vmax.f32 %v699, %v709
        %v711 = vsub.f32 %v699, %v710
        %v712 = vmul.f32 %v711, 1.442695
        %v713 = vpow.pop %v712
        %v715 = vlaneseq
        %v716 = vshrl.u32 %v715, 7
        %v717 = vsub.s32 0, %v716
        %v718 = vrot.slane %v710, %v717
        %v720 = vsub.f32 %v697, %v718
        %v721 = vsub.f32 %v698, %v718
        %v722 = vmul.f32 %v720, 1.442695
        %v723 = vpow.pop %v722
        %v724 = vmul.f32 %v721, 1.442695
        %v725 = vpow.pop %v724
        %v726 = vld [vmem:[#allocation3] sm:$0x1]
        %v727 = vmul.f32 %v713, %v726
        %v728 = vsel %vm700, %v723, 0.0
        %v729 = vsel %vm700, %v725, 0.0
        %v730 = vadd.f32 %v728, %v729
        %v731 = vrot.slane %v730, 4
        %v732 = vadd.f32 %v730, %v731
        %v733 = vrot.slane %v732, 2
        %v734 = vadd.f32 %v732, %v733
        %v735 = vrot.slane %v734, 1
        %v736 = vadd.f32 %v734, %v735
        %v737 = vadd.f32 %v727, %v736
        %vm738 = vcmask 0
        %739 = vst.msk [vmem:[#allocation3] sm:$0x1] %vm738, %v737
        %v740 = vld [vmem:[#allocation4] sm:$0x1]
        %742 = vset.pattern.permute.xlu0 0
        %743 = vperm.xlu0 %742, %v713
        %v744 = vpop.permute.xlu0 %743
        %v746 = vlaneseq
        %v747 = vshrl.u32 %v746, 7
        %v748 = vsub.s32 0, %v747
        %v749 = vrot.slane %v744, %v748
        %v750 = vmul.f32 %v749, %v740
        %752 = vset.pattern.permute.xlu0 0
        %753 = vperm.xlu0 %752, %v723
        %v754 = vpop.permute.xlu0 %753
        %757 = vset.pattern.permute.xlu0 0
        %758 = vperm.xlu0 %757, %v725
        %v759 = vpop.permute.xlu0 %758
        %v761 = vmul.f32 %v754, %v376
        %v762 = vmul.f32 %v759, %v377
        %v763 = vadd.f32 %v761, %v762
        %v764 = vrot.slane %v763, 4
        %v765 = vadd.f32 %v763, %v764
        %v766 = vrot.slane %v765, 2
        %v767 = vadd.f32 %v765, %v766
        %v768 = vrot.slane %v767, 1
        %v769 = vadd.f32 %v767, %v768
        %v770 = vadd.f32 %v750, %v769
        %771 = vst [vmem:[#allocation4] sm:$0x1] %v770
        %772 = vst.msk [vmem:[#allocation2] sm:$0x1] %vm738, %v710
        %p773 = scmp.eq.s32.totalorder %s29, 3
        // Predicated region
        $region65: #{tpu_custom_call.1} parent=55 // pred_check
          %p774 = pneg %p773
        $region66: #{tpu_custom_call.1} parent=55 // pred_check_branch
          %776 = sbr.rel (%p774) target = $region68
        $region67: #{tpu_custom_call.1} parent=55 // pred_region
          %v777 = vld [vmem:[#allocation4] sm:$0x1]
          %v778 = vld [vmem:[#allocation3] sm:$0x1]
          %780 = vset.pattern.permute.xlu0 0
          %781 = vperm.xlu0 %780, %v778
          %v782 = vpop.permute.xlu0 %781
          %v784 = vlaneseq
          %v785 = vshrl.u32 %v784, 7
          %v786 = vsub.s32 0, %v785
          %v787 = vrot.slane %v782, %v786
          %v788 = vrcp.pop %v787
          %v789 = vmul.f32 %v777, %v788
          %790 = vst [vmem:[#allocation9] sm:$0x1] %v789
          %v791 = vld [vmem:[%s7] sm:$0xff]
          %v792 = vld [vmem:[%s7 + $0x8] sm:$0xff]
          %v793 = vld [vmem:[%s7 + $0x10] sm:$0xff]
          %v794 = vld [vmem:[%s7 + $0x18] sm:$0xff]
          %v795 = vld [vmem:[%s7 + $0x20] sm:$0xff]
          %v796 = vld [vmem:[%s7 + $0x28] sm:$0xff]
          %v797 = vld [vmem:[%s7 + $0x30] sm:$0xff]
          %v798 = vld [vmem:[%s7 + $0x38] sm:$0xff]
          %v799 = vld [vmem:[%s7 + $0x40] sm:$0xff]
          %v800 = vld [vmem:[%s7 + $0x48] sm:$0xff]
          %v801 = vld [vmem:[%s7 + $0x50] sm:$0xff]
          %v802 = vld [vmem:[%s7 + $0x58] sm:$0xff]
          %v803 = vld [vmem:[%s7 + $0x60] sm:$0xff]
          %v804 = vld [vmem:[%s7 + $0x68] sm:$0xff]
          %v805 = vld [vmem:[%s7 + $0x70] sm:$0xff]
          %v806 = vld [vmem:[%s7 + $0x78] sm:$0xff]
          %v807 = vld [vmem:[%s8] sm:$0x1]
          %808 = vmatprep.subr.mxu0 0.0
          %809 = vmatpush1.msra.mxu0 %v806
          %810 = vmatprep.subr.mxu0 0.0
          %811 = vmatpush1.msra.mxu0 %v805
          %812 = vmatprep.subr.mxu0 0.0
          %813 = vmatpush1.msra.mxu0 %v804
          %814 = vmatprep.subr.mxu0 0.0
          %815 = vmatpush1.msra.mxu0 %v803
          %816 = vmatprep.subr.mxu0 0.0
          %817 = vmatpush1.msra.mxu0 %v802
          %818 = vmatprep.subr.mxu0 0.0
          %819 = vmatpush1.msra.mxu0 %v801
          %820 = vmatprep.subr.mxu0 0.0
          %821 = vmatpush1.msra.mxu0 %v800
          %822 = vmatprep.subr.mxu0 0.0
          %823 = vmatpush1.msra.mxu0 %v799
          %824 = vmatprep.subr.mxu0 0.0
          %825 = vmatpush1.msra.mxu0 %v798
          %826 = vmatprep.subr.mxu0 0.0
          %827 = vmatpush1.msra.mxu0 %v797
          %828 = vmatprep.subr.mxu0 0.0
          %829 = vmatpush1.msra.mxu0 %v796
          %830 = vmatprep.subr.mxu0 0.0
          %831 = vmatpush1.msra.mxu0 %v795
          %832 = vmatprep.subr.mxu0 0.0
          %833 = vmatpush1.msra.mxu0 %v794
          %834 = vmatprep.subr.mxu0 0.0
          %835 = vmatpush1.msra.mxu0 %v793
          %836 = vmatprep.subr.mxu0 0.0
          %837 = vmatpush1.msra.mxu0 %v792
          %838 = vmatprep.subr.mxu0 0.0
          %839 = vmatpush1.msra.mxu0 %v791
          %840 = vmatprep.subr.mxu0 0.0
          %841 = vmatpush2.msra.mxu0 0.0
          %842 = vmatprep.subr.mxu0 0.0
          %843 = vmatpush2.msra.mxu0 0.0
          %844 = vmatprep.subr.mxu0 0.0
          %845 = vmatpush2.msra.mxu0 0.0
          %846 = vmatprep.subr.mxu0 0.0
          %847 = vmatpush2.msra.mxu0 0.0
          %848 = vmatprep.subr.mxu0 0.0
          %849 = vmatpush2.msra.mxu0 0.0
          %850 = vmatprep.subr.mxu0 0.0
          %851 = vmatpush2.msra.mxu0 0.0
          %852 = vmatprep.subr.mxu0 0.0
          %853 = vmatpush2.msra.mxu0 0.0
          %854 = vmatprep.subr.mxu0 0.0
          %855 = vmatpush2.msra.mxu0 0.0
          %856 = vmatprep.subr.mxu0 0.0
          %857 = vmatpush2.msra.mxu0 0.0
          %858 = vmatprep.subr.mxu0 0.0
          %859 = vmatpush2.msra.mxu0 0.0
          %860 = vmatprep.subr.mxu0 0.0
          %861 = vmatpush2.msra.mxu0 0.0
          %862 = vmatprep.subr.mxu0 0.0
          %863 = vmatpush2.msra.mxu0 0.0
          %864 = vmatprep.subr.mxu0 0.0
          %865 = vmatpush2.msra.mxu0 0.0
          %866 = vmatprep.subr.mxu0 0.0
          %867 = vmatpush2.msra.mxu0 0.0
          %868 = vmatprep.subr.mxu0 0.0
          %869 = vmatpush2.msra.mxu0 0.0
          %870 = vmatprep.subr.mxu0 0.0
          %871 = vmatpush2.msra.mxu0 0.0
          %872 = vmatprep.mubr.f32.mxu0 0.0
          %873 = vmatmul.mubr.f32.gmra.mxu0 %v789
          %v874 = vpop.f32.mrf.mxu0
          %v875 = vadd.f32 %v807, %v874
          %v876 = vpop.f32.mrf.mxu0
          %877 = vdwg.mxu0
          %vm878 = vcmask 24576
          %879 = vst.msk [vmem:[#allocation10] sm:$0x1] %vm878, %v875
        $region68: #{tpu_custom_call.1} parent=55 // pred_fallthru
          _
        // Predicated region
        $region69: #{tpu_custom_call.1} parent=55 // pred_check
          %p880 = pneg %p236
        $region70: #{tpu_custom_call.1} parent=55 // pred_check_branch
          %882 = sbr.rel (%p880) target = $region72
        $region71: #{tpu_custom_call.1} parent=55 // pred_region
          %s884 = ssub.s32 16, 16
          %885 = vsyncadd [#allocation8], %s884
          %s887 = sshll.u32 [#allocation9], 4
          %s888 = int_to_ptr.vmem [resolvable:$true] %s887
          %890 = dma.vmem_to_hbm [thread:$0]  %s888, 16, %s9, [#allocation8]
        $region72: #{tpu_custom_call.1} parent=55 // pred_fallthru
          _
        // Predicated region
        $region73: #{tpu_custom_call.1} parent=55 // pred_check
          %p891 = pneg %p257
        $region74: #{tpu_custom_call.1} parent=55 // pred_check_branch
          %893 = sbr.rel (%p891) target = $region76
        $region75: #{tpu_custom_call.1} parent=55 // pred_region
          %s895 = ssub.s32 16, 16
          %896 = vsyncadd [#allocation11], %s895
          %s898 = sshll.u32 [#allocation10], 4
          %s899 = int_to_ptr.vmem [resolvable:$true] %s898
          %901 = dma.vmem_to_hbm [thread:$0]  %s899, 16, %s10, [#allocation11]
        $region76: #{tpu_custom_call.1} parent=55 // pred_fallthru
          _
        // Predicated region
        $region77: #{tpu_custom_call.1} parent=55 // pred_check
          %p902 = pneg %p236
        $region78: #{tpu_custom_call.1} parent=55 // pred_check_branch
          %904 = sbr.rel (%p902) target = $region80
        $region79: #{tpu_custom_call.1} parent=55 // pred_region
          %905 = dma.done [#allocation8], 16
        $region80: #{tpu_custom_call.1} parent=55 // pred_fallthru
          _
        // Predicated region
        $region81: #{tpu_custom_call.1} parent=55 // pred_check
          %p906 = pneg %p257
        $region82: #{tpu_custom_call.1} parent=55 // pred_check_branch
          %908 = sbr.rel (%p906) target = $region84
        $region83: #{tpu_custom_call.1} parent=55 // pred_region
          %909 = dma.done [#allocation11], 16
        $region84: #{tpu_custom_call.1} parent=55 // pred_fallthru
          _
      $region56: #{tpu_custom_call.1} parent=5 // pred_fallthru
        _
      %p910 = scmp.le.s32.totalorder 2, %s24
      // Predicated region
      $region85: #{tpu_custom_call.1} parent=5 // pred_check
        %p911 = pneg %p910
      $region86: #{tpu_custom_call.1} parent=5 // pred_check_branch
        %913 = sbr.rel (%p911) target = $region88
      $region87: #{tpu_custom_call.1} parent=5 // pred_region
        %s914 = ssub.s32 %s24, 2
      $region88: #{tpu_custom_call.1} parent=5 // pred_fallthru
        _
    $region6: #{tpu_custom_call.1} parent=1 // loop_footer
      %s28 = sadd.s32 1, %s24
    $region7: #{tpu_custom_call.1} parent=1 // loop_footer_branch
      %23 = sbr.rel target = $region3
    $region8: #{tpu_custom_call.1} parent=1 // loop_exit
      _
    %915 = vsyncpa [#allocation7], 1
    %s916 = scalar_lea.sflag [#allocation7], 1
    %917 = vsyncpa %s916, 1
    %918 = vsyncpa [#allocation8], 1
    %s919 = scalar_lea.sflag [#allocation8], 1
    %920 = vsyncpa %s919, 1
    %921 = vsyncpa [#allocation11], 1

</llo_original>
